<compile_context>
chip_gen: v7x
topology: tpu7x:2x2x1
jax: 0.10.0
libtpu: 0.0.40
codegen_flags: <defaults>
</compile_context>

<pallas_src>
import functools
import math

import jax
import jax.numpy as jnp
from jax.experimental import pallas as pl
from jax.experimental.pallas import tpu as pltpu

NEGATIVE_SLOPE = 1.0 / 100.0
HIDDEN = (400, 300)
H1_PAD = 512          # 400 padded to lane-friendly 512
H2_PAD = 384          # 300 padded to lane-friendly 384
TILE_B_MAX = 1024     # large batch tile: amortizes per-grid-step overhead


def _round_up(x, m):
    return (x + m - 1) // m * m


def _cdiv(a, b):
    return (a + b - 1) // b


def _tpu_flavor():
    """Return (device_kind_lowercase, num_tensorcores_per_chip)."""
    try:
        kind = jax.devices()[0].device_kind.lower()
    except Exception:  # pragma: no cover - fallback if no device is visible
        return "", 1
    return kind, (2 if "v7" in kind else 1)


def _epilogue_dtype(kind):
    # v6e / v7x have bf16-capable VALUs -> bf16 epilogue halves vreg traffic.
    # v5e (and older) keep the epilogue in f32.
    if "v6" in kind or "v7" in kind:
        return jnp.bfloat16
    return jnp.float32


def _choose_tiling(batch, num_cores):
    """Padding-aware, generation-aware batch tiling.

    Returns (tile_b, n_tiles, b_pad) with:
      * tile_b a multiple of 16 (bf16 sublane pack); multiple of 128 when
        n_tiles > 1 so the lane-dense (1, tile_b) output block is legal.
      * n_tiles even (>= 2) on 2-core chips when the batch is large enough,
        so both TensorCores get work; otherwise a single tile (no grid
        overhead) is preferred.
    """
    b16 = _round_up(batch, 16)
    if num_cores > 1 and b16 >= 256:
        n = _round_up(max(2, _cdiv(b16, TILE_B_MAX)), 2)
    else:
        n = _cdiv(b16, TILE_B_MAX)
    if n <= 1:
        return b16, 1, b16
    tile_b = _round_up(_cdiv(b16, n), 128)
    n = _cdiv(b16, tile_b)
    if num_cores > 1 and n > 1:
        n = _round_up(n, 2)
    if n <= 1:
        return b16, 1, b16
    return tile_b, n, n * tile_b


def discriminator_kernel(x_ref, w1_ref, b1_ref, w2_ref, b2_ref, w3_ref, b3_ref,
                         o_ref, *, epi_dtype):
    """One batch tile of the fused 3-layer MLP.

    x_ref  : (TILE_B, IN_PAD) bf16  -- streamed per grid step
    w1_ref : (IN_PAD, 512)    bf16  -- VMEM-resident MXU operand
    b1_ref : (1, 512)         f32
    w2_ref : (512, 384)       bf16  -- VMEM-resident MXU operand
    b2_ref : (1, 384)         f32
    w3_ref : (1, 384)         f32   -- layer-3 row
    b3_ref : (1, 1)           f32
    o_ref  : (1, TILE_B)      f32   -- lane-dense output row
    """
    slope = NEGATIVE_SLOPE

    # Layer 1: bf16 MXU matmul, f32 accumulation; epilogue in epi_dtype.
    h = jnp.dot(x_ref[...], w1_ref[...], preferred_element_type=jnp.float32)
    h = h.astype(epi_dtype) + b1_ref[...].astype(epi_dtype)
    h = jnp.maximum(h, h * slope)          # LeakyReLU (max form, 2 VPU ops)
    h = h.astype(jnp.bfloat16)             # bf16 operand for layer 2 (no-op if bf16 epi)

    # Layer 2: bf16 MXU matmul, f32 accumulation; epilogue in epi_dtype.
    h = jnp.dot(h, w2_ref[...], preferred_element_type=jnp.float32)
    h = h.astype(epi_dtype) + b2_ref[...].astype(epi_dtype)
    h = jnp.maximum(h, h * slope)

    # Layer 3 (384 -> 1), produced directly as a lane-dense (1, TILE_B) row:
    # contract both operands' feature axis (w3 is a (1,384) row, h is
    # (TILE_B,384)), so no in-kernel transpose of the result is needed.
    logits = jax.lax.dot_general(
        w3_ref[...].astype(h.dtype), h,
        dimension_numbers=(((1,), (1,)), ((), ())),
        preferred_element_type=jnp.float32)          # (1, TILE_B)
    logits = logits + b3_ref[...]

    # Stable sigmoid (logistic lowers to the EUP).
    o_ref[...] = jax.nn.sigmoid(logits).astype(o_ref.dtype)


def discriminator_forward(x, params):
    """x: (batch, state_dim + action_dim) float32 -> (batch, 1) float32."""
    w1, b1, w2, b2, w3, b3 = params
    batch, in_dim = x.shape
    in_pad = w1.shape[0]

    kind, num_cores = _tpu_flavor()
    epi_dtype = _epilogue_dtype(kind)
    tile_b, n_tiles, b_pad = _choose_tiling(batch, num_cores)

    # Zero-pad batch/feature dims and hand the MXU a bf16 operand.
    x_pad = jnp.zeros((b_pad, in_pad), jnp.bfloat16)
    x_pad = x_pad.at[:batch, :in_dim].set(x.astype(jnp.bfloat16))

    param_bytes = sum(int(p.size) * p.dtype.itemsize for p in params)
    cost = pl.CostEstimate(
        flops=2 * b_pad * (in_pad * H1_PAD + H1_PAD * H2_PAD + H2_PAD),
        transcendentals=b_pad,
        bytes_accessed=int(x_pad.size) * 2 + param_bytes + b_pad * 4,
    )

    def resident(shape):
        # Constant index_map => block never changes => stays VMEM-resident.
        return pl.BlockSpec(shape, lambda i: (0, 0))

    kernel = functools.partial(discriminator_kernel, epi_dtype=epi_dtype)

    out_row = pl.pallas_call(
        kernel,
        out_shape=jax.ShapeDtypeStruct((1, b_pad), jnp.float32),
        grid=(n_tiles,),
        in_specs=[
            pl.BlockSpec((tile_b, in_pad), lambda i: (i, 0)),   # x: streamed
            resident(w1.shape), resident(b1.shape),
            resident(w2.shape), resident(b2.shape),
            resident(w3.shape), resident(b3.shape),
        ],
        # Lane-dense output slab: each grid step writes a (1, tile_b) row.
        out_specs=pl.BlockSpec((1, tile_b), lambda i: (0, i)),
        compiler_params=pltpu.CompilerParams(
            dimension_semantics=("parallel",),   # batch tiles across TCs (v7x)
            vmem_limit_bytes=32 * 1024 * 1024,   # plenty for tile_b <= 1024
        ),
        cost_estimate=cost,
    )(x_pad, w1, b1, w2, b2, w3, b3)

    # (1, b_pad) lane-dense row -> (batch, 1) column, drop padded rows.
    return out_row[0, :batch, None]


def init_params(key, state_dim, action_dim):
    """torch.nn.Linear-style init (uniform +-1/sqrt(fan_in)), stored padded.

    Weights are (in_features_padded, out_features_padded) with zero padding;
    w1/w2 are bf16 (MXU operands), biases and the layer-3 row stay f32.
    """
    in_dim = state_dim + action_dim
    in_pad = _round_up(in_dim, 16)
    dims = [
        (in_dim, HIDDEN[0], in_pad, H1_PAD),
        (HIDDEN[0], HIDDEN[1], H1_PAD, H2_PAD),
        (HIDDEN[1], 1, H2_PAD, 1),
    ]
    mats = []
    for fan_in, fan_out, pad_in, pad_out in dims:
        key, kw, kb = jax.random.split(key, 3)
        bound = 1.0 / math.sqrt(fan_in)
        w = jax.random.uniform(kw, (fan_in, fan_out), jnp.float32, -bound, bound)
        b = jax.random.uniform(kb, (fan_out,), jnp.float32, -bound, bound)
        w_pad = jnp.zeros((pad_in, pad_out), jnp.float32).at[:fan_in, :fan_out].set(w)
        b_pad = jnp.zeros((1, pad_out), jnp.float32).at[0, :fan_out].set(b)
        mats.append((w_pad, b_pad))
    (w1, b1), (w2, b2), (w3, b3) = mats
    w1 = w1.astype(jnp.bfloat16)
    w2 = w2.astype(jnp.bfloat16)
    w3 = w3.reshape(1, H2_PAD)          # (384, 1) column -> (1, 384) row, f32
    return (w1, b1, w2, b2, w3, b3)


def reference_forward(x, params, epi_dtype):
    """Pure-JAX reference mirroring the kernel's exact dtype path
    (bf16 MXU operands, f32 accumulation, epi_dtype epilogue)."""
    w1, b1, w2, b2, w3, b3 = params
    batch, in_dim = x.shape
    in_pad = w1.shape[0]
    slope = NEGATIVE_SLOPE

    xb = jnp.zeros((batch, in_pad), jnp.bfloat16).at[:, :in_dim].set(
        x.astype(jnp.bfloat16))
    h = jnp.dot(xb, w1, preferred_element_type=jnp.float32)
    h = h.astype(epi_dtype) + b1.astype(epi_dtype)
    h = jnp.maximum(h, h * slope)
    h = h.astype(jnp.bfloat16)
    h = jnp.dot(h, w2, preferred_element_type=jnp.float32)
    h = h.astype(epi_dtype) + b2.astype(epi_dtype)
    h = jnp.maximum(h, h * slope)
    logits = jax.lax.dot_general(
        w3.astype(h.dtype), h,
        dimension_numbers=(((1,), (1,)), ((), ())),
        preferred_element_type=jnp.float32)          # (1, batch)
    logits = logits + b3
    return jnp.transpose(jax.nn.sigmoid(logits))     # (batch, 1)


if __name__ == "__main__":
    state_dim = 8
    action_dim = 4
    batch = 2

    key = jax.random.PRNGKey(0)
    key, kx = jax.random.split(key)
    x = jax.random.normal(kx, (batch, state_dim + action_dim), jnp.float32)

    params = init_params(key, state_dim, action_dim)

    out = jax.block_until_ready(discriminator_forward(x, params))

    kind, _ = _tpu_flavor()
    ref = reference_forward(x, params, _epilogue_dtype(kind))

    assert out.shape == (batch, 1), out.shape
    assert jnp.allclose(out, ref, atol=5e-3, rtol=5e-3), (out, ref)

    print("KERNEL_OK")
</pallas_src>

<mosaic_0001>
module attributes {stable_mosaic.version = 11 : i64} {
  func.func @discriminator_kernel(%arg0: i32, %arg1: memref<16x16xbf16, #tpu.memory_space<vmem>>, %arg2: memref<16x512xbf16, #tpu.memory_space<vmem>>, %arg3: memref<1x512xf32, #tpu.memory_space<vmem>>, %arg4: memref<512x384xbf16, #tpu.memory_space<vmem>>, %arg5: memref<1x384xf32, #tpu.memory_space<vmem>>, %arg6: memref<1x384xf32, #tpu.memory_space<vmem>>, %arg7: memref<1x1xf32, #tpu.memory_space<vmem>>, %arg8: memref<1x16xf32, #tpu.memory_space<vmem>>) attributes {dimension_semantics = [#tpu.dimension_semantics<parallel>], iteration_bounds = array<i64: 1>, scalar_prefetch = 0 : i64, scratch_operands = 0 : i64, tpu.core_type = #tpu.core_type<tc>, window_params = [{transform_indices = @transform_0, window_bounds = array<i64: 16, 16>}, {pipeline_mode = #tpu.pipeline_mode<synchronous>, transform_indices = @transform_1, window_bounds = array<i64: 16, 512>}, {pipeline_mode = #tpu.pipeline_mode<synchronous>, transform_indices = @transform_2, window_bounds = array<i64: 1, 512>}, {pipeline_mode = #tpu.pipeline_mode<synchronous>, transform_indices = @transform_3, window_bounds = array<i64: 512, 384>}, {pipeline_mode = #tpu.pipeline_mode<synchronous>, transform_indices = @transform_4, window_bounds = array<i64: 1, 384>}, {pipeline_mode = #tpu.pipeline_mode<synchronous>, transform_indices = @transform_5, window_bounds = array<i64: 1, 384>}, {pipeline_mode = #tpu.pipeline_mode<synchronous>, transform_indices = @transform_6, window_bounds = array<i64: 1, 1>}, {transform_indices = @transform_7, window_bounds = array<i64: 1, 16>}]} {
    %c0 = arith.constant 0 : index
    %c0_0 = arith.constant 0 : index
    %0 = vector.load %arg1[%c0, %c0_0] : memref<16x16xbf16, #tpu.memory_space<vmem>>, vector<16x16xbf16>
    %c0_1 = arith.constant 0 : index
    %c0_2 = arith.constant 0 : index
    %1 = vector.load %arg2[%c0_1, %c0_2] : memref<16x512xbf16, #tpu.memory_space<vmem>>, vector<16x512xbf16>
    %cst = arith.constant dense<0.000000e+00> : vector<16x512xf32>
    %2 = tpu.matmul %0, %1, %cst {dimension_numbers = #tpu.dot_dimension_numbers<[1], [0], [0], [1], [0, 0, 1, 1], [], []>} : vector<16x16xbf16>, vector<16x512xbf16>, vector<16x512xf32> -> vector<16x512xf32>
    %c0_3 = arith.constant 0 : index
    %c0_4 = arith.constant 0 : index
    %3 = vector.load %arg3[%c0_3, %c0_4] : memref<1x512xf32, #tpu.memory_space<vmem>>, vector<1x512xf32>
    %4 = vector.broadcast %3 : vector<1x512xf32> to vector<16x512xf32>
    %5 = arith.addf %2, %4 : vector<16x512xf32>
    %cst_5 = arith.constant 0.00999999977 : f32
    %6 = vector.broadcast %cst_5 : f32 to vector<16x512xf32>
    %7 = arith.mulf %5, %6 : vector<16x512xf32>
    %8 = arith.maximumf %5, %7 : vector<16x512xf32>
    %9 = arith.truncf %8 : vector<16x512xf32> to vector<16x512xbf16>
    %c0_6 = arith.constant 0 : index
    %c0_7 = arith.constant 0 : index
    %10 = vector.load %arg4[%c0_6, %c0_7] : memref<512x384xbf16, #tpu.memory_space<vmem>>, vector<512x384xbf16>
    %cst_8 = arith.constant dense<0.000000e+00> : vector<16x384xf32>
    %11 = tpu.matmul %9, %10, %cst_8 {dimension_numbers = #tpu.dot_dimension_numbers<[1], [0], [0], [1], [0, 0, 1, 1], [], []>} : vector<16x512xbf16>, vector<512x384xbf16>, vector<16x384xf32> -> vector<16x384xf32>
    %c0_9 = arith.constant 0 : index
    %c0_10 = arith.constant 0 : index
    %12 = vector.load %arg5[%c0_9, %c0_10] : memref<1x384xf32, #tpu.memory_space<vmem>>, vector<1x384xf32>
    %13 = vector.broadcast %12 : vector<1x384xf32> to vector<16x384xf32>
    %14 = arith.addf %11, %13 : vector<16x384xf32>
    %cst_11 = arith.constant 0.00999999977 : f32
    %15 = vector.broadcast %cst_11 : f32 to vector<16x384xf32>
    %16 = arith.mulf %14, %15 : vector<16x384xf32>
    %17 = arith.maximumf %14, %16 : vector<16x384xf32>
    %c0_12 = arith.constant 0 : index
    %c0_13 = arith.constant 0 : index
    %18 = vector.load %arg6[%c0_12, %c0_13] : memref<1x384xf32, #tpu.memory_space<vmem>>, vector<1x384xf32>
    %cst_14 = arith.constant dense<0.000000e+00> : vector<1x16xf32>
    %19 = tpu.matmul %18, %17, %cst_14 {dimension_numbers = #tpu.dot_dimension_numbers<[1], [1], [0], [0], [0, 0, 1, 0], [], []>} : vector<1x384xf32>, vector<16x384xf32>, vector<1x16xf32> -> vector<1x16xf32>
    %c0_15 = arith.constant 0 : index
    %c0_16 = arith.constant 0 : index
    %20 = vector.load %arg7[%c0_15, %c0_16] : memref<1x1xf32, #tpu.memory_space<vmem>>, vector<1x1xf32>
    %21 = vector.broadcast %20 : vector<1x1xf32> to vector<1x16xf32>
    %22 = arith.addf %19, %21 : vector<1x16xf32>
    %23 = arith.negf %22 : vector<1x16xf32>
    %24 = math.exp %23 : vector<1x16xf32>
    %cst_17 = arith.constant 1.000000e+00 : f32
    %25 = vector.broadcast %cst_17 : f32 to vector<1x16xf32>
    %26 = arith.addf %25, %24 : vector<1x16xf32>
    %27 = arith.divf %25, %26 : vector<1x16xf32>
    %c0_18 = arith.constant 0 : index
    %c0_19 = arith.constant 0 : index
    %28 = vector.load %arg8[%c0_18, %c0_19] : memref<1x16xf32, #tpu.memory_space<vmem>>, vector<1x16xf32>
    tpu.vector_store %arg8[%c0_18, %c0_19], %27 {strides = array<i32>} : memref<1x16xf32, #tpu.memory_space<vmem>>, vector<1x16xf32>,
    return
  }
  func.func @transform_0(%arg0: i32) -> (i32, i32) {
    %c0_i32 = arith.constant 0 : i32
    %c0_i32_0 = arith.constant 0 : i32
    return %arg0, %c0_i32 : i32, i32
  }
  func.func @transform_1(%arg0: i32) -> (i32, i32) {
    %c0_i32 = arith.constant 0 : i32
    %c0_i32_0 = arith.constant 0 : i32
    %c0_i32_1 = arith.constant 0 : i32
    return %c0_i32, %c0_i32_0 : i32, i32
  }
  func.func @transform_2(%arg0: i32) -> (i32, i32) {
    %c0_i32 = arith.constant 0 : i32
    %c0_i32_0 = arith.constant 0 : i32
    %c0_i32_1 = arith.constant 0 : i32
    return %c0_i32, %c0_i32_0 : i32, i32
  }
  func.func @transform_3(%arg0: i32) -> (i32, i32) {
    %c0_i32 = arith.constant 0 : i32
    %c0_i32_0 = arith.constant 0 : i32
    %c0_i32_1 = arith.constant 0 : i32
    return %c0_i32, %c0_i32_0 : i32, i32
  }
  func.func @transform_4(%arg0: i32) -> (i32, i32) {
    %c0_i32 = arith.constant 0 : i32
    %c0_i32_0 = arith.constant 0 : i32
    %c0_i32_1 = arith.constant 0 : i32
    return %c0_i32, %c0_i32_0 : i32, i32
  }
  func.func @transform_5(%arg0: i32) -> (i32, i32) {
    %c0_i32 = arith.constant 0 : i32
    %c0_i32_0 = arith.constant 0 : i32
    %c0_i32_1 = arith.constant 0 : i32
    return %c0_i32, %c0_i32_0 : i32, i32
  }
  func.func @transform_6(%arg0: i32) -> (i32, i32) {
    %c0_i32 = arith.constant 0 : i32
    %c0_i32_0 = arith.constant 0 : i32
    %c0_i32_1 = arith.constant 0 : i32
    return %c0_i32, %c0_i32_0 : i32, i32
  }
  func.func @transform_7(%arg0: i32) -> (i32, i32) {
    %c0_i32 = arith.constant 0 : i32
    %c0_i32_0 = arith.constant 0 : i32
    return %c0_i32, %arg0 : i32, i32
  }
}

</mosaic_0001>

<llo_original>
// kernel: tpu_custom_call.1
$region0: #{tpu_custom_call.1}
  #allocation0 [shape = 'u32[]', space=smem, size = 0x4, offset = 0x4, fixed_abs, tag = 'smem constant byte address 0x4 - core index']
  #allocation1 [shape = 'u32[144,128]{1,0:T(1,128)}', space=vmem, size = 0x12000, scoped, tag = 'internal scratch']
  #allocation2 [shape = 'f32[1,1]{1,0:T(1,128)S(1)}', space=vmem, size = 0x200, scoped, tag = 'scoped memory for tpu_custom_call.1']
  %s0 = inlined_call_operand.hbm [shape: bf16[16,16], index: 0, kind: input, shape index: {}]
  %s1 = inlined_call_operand.hbm [shape: bf16[16,512], index: 1, kind: input, shape index: {}]
  %s2 = inlined_call_operand.vmem [shape: f32[1,512], index: 2, kind: input, shape index: {}]
  %s3 = inlined_call_operand.hbm [shape: bf16[512,384], index: 3, kind: input, shape index: {}]
  %s4 = inlined_call_operand.vmem [shape: f32[1,384], index: 4, kind: input, shape index: {}]
  %s5 = inlined_call_operand.vmem [shape: f32[1,384], index: 5, kind: input, shape index: {}]
  %s6 = inlined_call_operand.<no memory space> [shape: f32[1,1], index: 6, kind: input, shape index: {}]
  %s7 = inlined_call_operand.hbm [shape: f32[1,16], index: 7, kind: output, shape index: {}]
  %s8 = sld [smem:[#allocation0]]
  $region50: #{tpu_custom_call.1} parent=0
    _
  %s10 = ssub.s32 1, %s8
  %s11 = scalar_select 0, %s10, %s8
  %v12 = vstv %s6
  %13 = vst [vmem:[#allocation2] sm:$0x1] %v12
  $region1: #{tpu_custom_call.1} parent=0
    #allocation3 [shape = 'u8[4096]{0}', space=vmem, size = 0x1000, scoped, tag = 'input window, operand 0, single buffered']
    #allocation4 [shape = 's32[1]{0}', space=sflag, size = 0x4, scoped, tag = 'scoped memory for tpu_custom_call.1']
    #allocation5 [shape = 's32[1]{0}', space=sflag, size = 0x4, scoped, tag = 'scoped memory for tpu_custom_call.1']
    #allocation6 [shape = 'u8[16384]{0}', space=vmem, size = 0x4000, scoped, tag = 'input window, operand 1, single buffered']
    #allocation7 [shape = 's32[1]{0}', space=sflag, size = 0x4, scoped, tag = 'scoped memory for tpu_custom_call.1']
    #allocation8 [shape = 'u8[393216]{0}', space=vmem, size = 0x60000, scoped, tag = 'input window, operand 3, single buffered']
    #allocation9 [shape = 'u8[512]{0}', space=vmem, size = 0x400, scoped, tag = 'output window, operand 0, single buffered']
    %14 = vsyncpa [#allocation4], 0
    %15 = vsyncpa [#allocation7], 0
    %16 = vsyncpa [#allocation5], 0
    // Predicated region
    $region2: #{tpu_custom_call.1} parent=1 // pred_check
      _
    $region3: #{tpu_custom_call.1} parent=1 // pred_check_branch
      %18 = sbr.rel (0) target = $region5
    $region4: #{tpu_custom_call.1} parent=1 // pred_region
      %s20 = ssub.s32 128, 128
      %21 = vsyncadd [#allocation4], %s20
      %s22 = sshll.u32 [#allocation3], 4
      %s23 = int_to_ptr.vmem [resolvable:$true] %s22
      %28 = dma.hbm_to_vmem [thread:$0]  %s0, 128, %s23, [#allocation4], 64, 64, 4
    $region5: #{tpu_custom_call.1} parent=1 // pred_fallthru
      _
    // Predicated region
    $region6: #{tpu_custom_call.1} parent=1 // pred_check
      _
    $region7: #{tpu_custom_call.1} parent=1 // pred_check_branch
      %30 = sbr.rel (0) target = $region9
    $region8: #{tpu_custom_call.1} parent=1 // pred_region
      %s32 = ssub.s32 512, 512
      %33 = vsyncadd [#allocation7], %s32
      %s34 = sshll.u32 [#allocation6], 4
      %s35 = int_to_ptr.vmem [resolvable:$true] %s34
      %40 = dma.hbm_to_vmem [thread:$0]  %s1, 512, %s35, [#allocation7], 256, 256, 16
    $region9: #{tpu_custom_call.1} parent=1 // pred_fallthru
      _
    // Predicated region
    $region10: #{tpu_custom_call.1} parent=1 // pred_check
      _
    $region11: #{tpu_custom_call.1} parent=1 // pred_check_branch
      %42 = sbr.rel (0) target = $region13
    $region12: #{tpu_custom_call.1} parent=1 // pred_region
      _
    $region13: #{tpu_custom_call.1} parent=1 // pred_fallthru
      _
    // Predicated region
    $region14: #{tpu_custom_call.1} parent=1 // pred_check
      _
    $region15: #{tpu_custom_call.1} parent=1 // pred_check_branch
      %44 = sbr.rel (0) target = $region17
    $region16: #{tpu_custom_call.1} parent=1 // pred_region
      %s46 = ssub.s32 12288, 12288
      %47 = vsyncadd [#allocation7], %s46
      %s48 = sshll.u32 [#allocation8], 4
      %s49 = int_to_ptr.vmem [resolvable:$true] %s48
      %54 = dma.hbm_to_vmem [thread:$0]  %s3, 12288, %s49, [#allocation7], 192, 192, 12
    $region17: #{tpu_custom_call.1} parent=1 // pred_fallthru
      _
    // Predicated region
    $region18: #{tpu_custom_call.1} parent=1 // pred_check
      _
    $region19: #{tpu_custom_call.1} parent=1 // pred_check_branch
      %56 = sbr.rel (0) target = $region21
    $region20: #{tpu_custom_call.1} parent=1 // pred_region
      _
    $region21: #{tpu_custom_call.1} parent=1 // pred_fallthru
      _
    // Predicated region
    $region22: #{tpu_custom_call.1} parent=1 // pred_check
      _
    $region23: #{tpu_custom_call.1} parent=1 // pred_check_branch
      %58 = sbr.rel (0) target = $region25
    $region24: #{tpu_custom_call.1} parent=1 // pred_region
      _
    $region25: #{tpu_custom_call.1} parent=1 // pred_fallthru
      _
    // Predicated region
    $region26: #{tpu_custom_call.1} parent=1 // pred_check
      _
    $region27: #{tpu_custom_call.1} parent=1 // pred_check_branch
      %60 = sbr.rel (0) target = $region29
    $region28: #{tpu_custom_call.1} parent=1 // pred_region
      _
    $region29: #{tpu_custom_call.1} parent=1 // pred_fallthru
      _
    // Predicated region
    $region30: #{tpu_custom_call.1} parent=1 // pred_check
      _
    $region31: #{tpu_custom_call.1} parent=1 // pred_check_branch
      %62 = sbr.rel (0) target = $region33
    $region32: #{tpu_custom_call.1} parent=1 // pred_region
      %63 = dma.done [#allocation4], 128
    $region33: #{tpu_custom_call.1} parent=1 // pred_fallthru
      _
    // Predicated region
    $region34: #{tpu_custom_call.1} parent=1 // pred_check
      _
    $region35: #{tpu_custom_call.1} parent=1 // pred_check_branch
      %65 = sbr.rel (0) target = $region37
    $region36: #{tpu_custom_call.1} parent=1 // pred_region
      %66 = dma.done [#allocation7], 512
    $region37: #{tpu_custom_call.1} parent=1 // pred_fallthru
      _
    // Predicated region
    $region38: #{tpu_custom_call.1} parent=1 // pred_check
      _
    $region39: #{tpu_custom_call.1} parent=1 // pred_check_branch
      %68 = sbr.rel (0) target = $region41
    $region40: #{tpu_custom_call.1} parent=1 // pred_region
      %69 = dma.done [#allocation7], 12288
    $region41: #{tpu_custom_call.1} parent=1 // pred_fallthru
      _
    %v71 = vld [vmem:[#allocation3] sm:$0xf]
    %v72 = vld [vmem:[#allocation3 + $0x4] sm:$0xf]
    %v73 = vld [vmem:[#allocation6] sm:$0xff]
    %v74 = vld [vmem:[#allocation6 + $0x8] sm:$0xff]
    %v75 = vld [vmem:[#allocation6 + $0x10] sm:$0xff]
    %v76 = vld [vmem:[#allocation6 + $0x18] sm:$0xff]
    %v77 = vld [vmem:[%s2] sm:$0xf]
    %v79 = vlaneseq
    %v80 = vshrl.u32 %v79, 7
    %v81 = vsub.s32 0, %v80
    %v82 = vrot.slane %v77, %v81
    %v83 = vlaneseq
    %v84 = vshrl.u32 %v83, 7
    %v85 = vsub.s32 1, %v84
    %v86 = vrot.slane %v77, %v85
    %v87 = vlaneseq
    %v88 = vshrl.u32 %v87, 7
    %v89 = vsub.s32 2, %v88
    %v90 = vrot.slane %v77, %v89
    %v91 = vlaneseq
    %v92 = vshrl.u32 %v91, 7
    %v93 = vsub.s32 3, %v92
    %v94 = vrot.slane %v77, %v93
    %v101 = vunpack.c.l.b16 %v71
    %v102 = vunpack.c.l.b16 %v72
    %v103 = vpack.c.b16 %v102, %v101
    %v108 = vunpack.c.l.b16 %v73
    %v109 = vunpack.c.h.b16 %v73
    %v110 = vunpack.c.l.b16 %v74
    %v111 = vunpack.c.h.b16 %v74
    %v112 = vunpack.c.l.b16 %v75
    %v113 = vunpack.c.h.b16 %v75
    %v114 = vunpack.c.l.b16 %v76
    %v115 = vunpack.c.h.b16 %v76
    %v116 = vpack.c.b16 %v112, %v108
    %v117 = vpack.c.b16 %v113, %v109
    %v118 = vpack.c.b16 %v114, %v110
    %v119 = vpack.c.b16 %v115, %v111
    %vm124 = vcmask 130048
    %v126 = vsel %vm124, %v103, 0
    %128 = vmatprep.subr.bf16.mxu0 %v117
    %129 = vmatpush1.bf16.msra.mxu0 %v116
    %130 = vmatprep.subr.bf16.mxu0 0
    %131 = vmatpush1.bf16.msra.mxu0 0
    %132 = vmatprep.subr.bf16.mxu0 0
    %133 = vmatpush1.bf16.msra.mxu0 0
    %134 = vmatprep.subr.bf16.mxu0 0
    %135 = vmatpush1.bf16.msra.mxu0 0
    %136 = vmatprep.subr.bf16.mxu0 0
    %137 = vmatpush1.bf16.msra.mxu0 0
    %138 = vmatprep.subr.bf16.mxu0 0
    %139 = vmatpush1.bf16.msra.mxu0 0
    %140 = vmatprep.subr.bf16.mxu0 0
    %141 = vmatpush1.bf16.msra.mxu0 0
    %142 = vmatprep.subr.bf16.mxu0 0
    %143 = vmatpush1.bf16.msra.mxu0 0
    %144 = vmatprep.subr.bf16.mxu0 0
    %145 = vmatpush1.bf16.msra.mxu0 0
    %146 = vmatprep.subr.bf16.mxu0 0
    %147 = vmatpush1.bf16.msra.mxu0 0
    %148 = vmatprep.subr.bf16.mxu0 0
    %149 = vmatpush1.bf16.msra.mxu0 0
    %150 = vmatprep.subr.bf16.mxu0 0
    %151 = vmatpush1.bf16.msra.mxu0 0
    %152 = vmatprep.subr.bf16.mxu0 0
    %153 = vmatpush1.bf16.msra.mxu0 0
    %154 = vmatprep.subr.bf16.mxu0 0
    %155 = vmatpush1.bf16.msra.mxu0 0
    %156 = vmatprep.subr.bf16.mxu0 0
    %157 = vmatpush1.bf16.msra.mxu0 0
    %158 = vmatprep.subr.bf16.mxu0 0
    %159 = vmatpush1.bf16.msra.mxu0 0
    %160 = vmatprep.mubr.bf16.mxu0 0
    %161 = vmatmul.mubr.bf16.gmra.mrb[0].mxu0 %v126
    %v162 = vpop.f32.mrb[0].mxu0
    %v163 = vadd.f32 %v82, %v162
    %v164 = vpop.f32.mrb[0].mxu0
    %v165 = vadd.f32 %v86, %v164
    %v166 = vpop.f32.mrb[0].mxu0
    %v167 = vadd.f32 %v82, %v166
    %v168 = vpop.f32.mrb[0].mxu0
    %v169 = vadd.f32 %v86, %v168
    %170 = vdwg.mxu0
    %171 = vmatprep.subr.bf16.mxu0 %v119
    %172 = vmatpush1.bf16.msra.mxu0 %v118
    %173 = vmatprep.subr.bf16.mxu0 0
    %174 = vmatpush1.bf16.msra.mxu0 0
    %175 = vmatprep.subr.bf16.mxu0 0
    %176 = vmatpush1.bf16.msra.mxu0 0
    %177 = vmatprep.subr.bf16.mxu0 0
    %178 = vmatpush1.bf16.msra.mxu0 0
    %179 = vmatprep.subr.bf16.mxu0 0
    %180 = vmatpush1.bf16.msra.mxu0 0
    %181 = vmatprep.subr.bf16.mxu0 0
    %182 = vmatpush1.bf16.msra.mxu0 0
    %183 = vmatprep.subr.bf16.mxu0 0
    %184 = vmatpush1.bf16.msra.mxu0 0
    %185 = vmatprep.subr.bf16.mxu0 0
    %186 = vmatpush1.bf16.msra.mxu0 0
    %187 = vmatprep.subr.bf16.mxu0 0
    %188 = vmatpush1.bf16.msra.mxu0 0
    %189 = vmatprep.subr.bf16.mxu0 0
    %190 = vmatpush1.bf16.msra.mxu0 0
    %191 = vmatprep.subr.bf16.mxu0 0
    %192 = vmatpush1.bf16.msra.mxu0 0
    %193 = vmatprep.subr.bf16.mxu0 0
    %194 = vmatpush1.bf16.msra.mxu0 0
    %195 = vmatprep.subr.bf16.mxu0 0
    %196 = vmatpush1.bf16.msra.mxu0 0
    %197 = vmatprep.subr.bf16.mxu0 0
    %198 = vmatpush1.bf16.msra.mxu0 0
    %199 = vmatprep.subr.bf16.mxu0 0
    %200 = vmatpush1.bf16.msra.mxu0 0
    %201 = vmatprep.subr.bf16.mxu0 0
    %202 = vmatpush1.bf16.msra.mxu0 0
    %203 = vmatprep.mubr.bf16.mxu0 0
    %204 = vmatmul.mubr.bf16.gmra.mrb[0].mxu0 %v126
    %v205 = vpop.f32.mrb[0].mxu0
    %v206 = vadd.f32 %v90, %v205
    %v207 = vpop.f32.mrb[0].mxu0
    %v208 = vadd.f32 %v94, %v207
    %v209 = vpop.f32.mrb[0].mxu0
    %v210 = vadd.f32 %v90, %v209
    %v211 = vpop.f32.mrb[0].mxu0
    %v212 = vadd.f32 %v94, %v211
    %213 = vdwg.mxu0
    %v214 = vmul.f32 %v163, 0.01
    %v215 = vmul.f32 %v165, 0.01
    %v216 = vmul.f32 %v206, 0.01
    %v217 = vmul.f32 %v208, 0.01
    %v218 = vmul.f32 %v167, 0.01
    %v219 = vmul.f32 %v169, 0.01
    %v220 = vmul.f32 %v210, 0.01
    %v221 = vmul.f32 %v212, 0.01
    %v222 = vmax.f32 %v163, %v214
    %v223 = vmax.f32 %v165, %v215
    %v224 = vmax.f32 %v206, %v216
    %v225 = vmax.f32 %v208, %v217
    %v226 = vmax.f32 %v167, %v218
    %v227 = vmax.f32 %v169, %v219
    %v228 = vmax.f32 %v210, %v220
    %v229 = vmax.f32 %v212, %v221
    %v230 = vpack.c.bf16 %v226, %v222
    %v231 = vpack.c.bf16 %v227, %v223
    %v232 = vpack.c.bf16 %v228, %v224
    %v233 = vpack.c.bf16 %v229, %v225
    %v234 = vld [vmem:[#allocation8] sm:$0xff]
    %v235 = vld [vmem:[#allocation8 + $0x8] sm:$0xf]
    %v236 = vld [vmem:[#allocation8 + $0xc] sm:$0xff]
    %v237 = vld [vmem:[#allocation8 + $0x14] sm:$0xf]
    %v238 = vld [vmem:[#allocation8 + $0x18] sm:$0xff]
    %v239 = vld [vmem:[#allocation8 + $0x20] sm:$0xf]
    %v240 = vld [vmem:[#allocation8 + $0x24] sm:$0xff]
    %v241 = vld [vmem:[#allocation8 + $0x2c] sm:$0xf]
    %v242 = vld [vmem:[#allocation8 + $0x30] sm:$0xff]
    %v243 = vld [vmem:[#allocation8 + $0x38] sm:$0xf]
    %v244 = vld [vmem:[#allocation8 + $0x3c] sm:$0xff]
    %v245 = vld [vmem:[#allocation8 + $0x44] sm:$0xf]
    %v246 = vld [vmem:[#allocation8 + $0x48] sm:$0xff]
    %v247 = vld [vmem:[#allocation8 + $0x50] sm:$0xf]
    %v248 = vld [vmem:[#allocation8 + $0x54] sm:$0xff]
    %v249 = vld [vmem:[#allocation8 + $0x5c] sm:$0xf]
    %v250 = vld [vmem:[#allocation8 + $0x60] sm:$0xff]
    %v251 = vld [vmem:[#allocation8 + $0x68] sm:$0xf]
    %v252 = vld [vmem:[#allocation8 + $0x6c] sm:$0xff]
    %v253 = vld [vmem:[#allocation8 + $0x74] sm:$0xf]
    %v254 = vld [vmem:[#allocation8 + $0x78] sm:$0xff]
    %v255 = vld [vmem:[#allocation8 + $0x80] sm:$0xf]
    %v256 = vld [vmem:[#allocation8 + $0x84] sm:$0xff]
    %v257 = vld [vmem:[#allocation8 + $0x8c] sm:$0xf]
    %v258 = vld [vmem:[#allocation8 + $0x90] sm:$0xff]
    %v259 = vld [vmem:[#allocation8 + $0x98] sm:$0xf]
    %v260 = vld [vmem:[#allocation8 + $0x9c] sm:$0xff]
    %v261 = vld [vmem:[#allocation8 + $0xa4] sm:$0xf]
    %v262 = vld [vmem:[#allocation8 + $0xa8] sm:$0xff]
    %v263 = vld [vmem:[#allocation8 + $0xb0] sm:$0xf]
    %v264 = vld [vmem:[#allocation8 + $0xb4] sm:$0xff]
    %v265 = vld [vmem:[#allocation8 + $0xbc] sm:$0xf]
    %v266 = vld [vmem:[#allocation8 + $0xc0] sm:$0xff]
    %v267 = vld [vmem:[#allocation8 + $0xc8] sm:$0xf]
    %v268 = vld [vmem:[#allocation8 + $0xcc] sm:$0xff]
    %v269 = vld [vmem:[#allocation8 + $0xd4] sm:$0xf]
    %v270 = vld [vmem:[#allocation8 + $0xd8] sm:$0xff]
    %v271 = vld [vmem:[#allocation8 + $0xe0] sm:$0xf]
    %v272 = vld [vmem:[#allocation8 + $0xe4] sm:$0xff]
    %v273 = vld [vmem:[#allocation8 + $0xec] sm:$0xf]
    %v274 = vld [vmem:[#allocation8 + $0xf0] sm:$0xff]
    %v275 = vld [vmem:[#allocation8 + $0xf8] sm:$0xf]
    %v276 = vld [vmem:[#allocation8 + $0xfc] sm:$0xff]
    %v277 = vld [vmem:[#allocation8 + $0x104] sm:$0xf]
    %v278 = vld [vmem:[#allocation8 + $0x108] sm:$0xff]
    %v279 = vld [vmem:[#allocation8 + $0x110] sm:$0xf]
    %v280 = vld [vmem:[#allocation8 + $0x114] sm:$0xff]
    %v281 = vld [vmem:[#allocation8 + $0x11c] sm:$0xf]
    %v282 = vld [vmem:[#allocation8 + $0x120] sm:$0xff]
    %v283 = vld [vmem:[#allocation8 + $0x128] sm:$0xf]
    %v284 = vld [vmem:[#allocation8 + $0x12c] sm:$0xff]
    %v285 = vld [vmem:[#allocation8 + $0x134] sm:$0xf]
    %v286 = vld [vmem:[#allocation8 + $0x138] sm:$0xff]
    %v287 = vld [vmem:[#allocation8 + $0x140] sm:$0xf]
    %v288 = vld [vmem:[#allocation8 + $0x144] sm:$0xff]
    %v289 = vld [vmem:[#allocation8 + $0x14c] sm:$0xf]
    %v290 = vld [vmem:[#allocation8 + $0x150] sm:$0xff]
    %v291 = vld [vmem:[#allocation8 + $0x158] sm:$0xf]
    %v292 = vld [vmem:[#allocation8 + $0x15c] sm:$0xff]
    %v293 = vld [vmem:[#allocation8 + $0x164] sm:$0xf]
    %v294 = vld [vmem:[#allocation8 + $0x168] sm:$0xff]
    %v295 = vld [vmem:[#allocation8 + $0x170] sm:$0xf]
    %v296 = vld [vmem:[#allocation8 + $0x174] sm:$0xff]
    %v297 = vld [vmem:[#allocation8 + $0x17c] sm:$0xf]
    %v298 = vld [vmem:[#allocation8 + $0x180] sm:$0xff]
    %v299 = vld [vmem:[#allocation8 + $0x188] sm:$0xf]
    %v300 = vld [vmem:[#allocation8 + $0x18c] sm:$0xff]
    %v301 = vld [vmem:[#allocation8 + $0x194] sm:$0xf]
    %v302 = vld [vmem:[#allocation8 + $0x198] sm:$0xff]
    %v303 = vld [vmem:[#allocation8 + $0x1a0] sm:$0xf]
    %v304 = vld [vmem:[#allocation8 + $0x1a4] sm:$0xff]
    %v305 = vld [vmem:[#allocation8 + $0x1ac] sm:$0xf]
    %v306 = vld [vmem:[#allocation8 + $0x1b0] sm:$0xff]
    %v307 = vld [vmem:[#allocation8 + $0x1b8] sm:$0xf]
    %v308 = vld [vmem:[#allocation8 + $0x1bc] sm:$0xff]
    %v309 = vld [vmem:[#allocation8 + $0x1c4] sm:$0xf]
    %v310 = vld [vmem:[#allocation8 + $0x1c8] sm:$0xff]
    %v311 = vld [vmem:[#allocation8 + $0x1d0] sm:$0xf]
    %v312 = vld [vmem:[#allocation8 + $0x1d4] sm:$0xff]
    %v313 = vld [vmem:[#allocation8 + $0x1dc] sm:$0xf]
    %v314 = vld [vmem:[#allocation8 + $0x1e0] sm:$0xff]
    %v315 = vld [vmem:[#allocation8 + $0x1e8] sm:$0xf]
    %v316 = vld [vmem:[#allocation8 + $0x1ec] sm:$0xff]
    %v317 = vld [vmem:[#allocation8 + $0x1f4] sm:$0xf]
    %v318 = vld [vmem:[#allocation8 + $0x1f8] sm:$0xff]
    %v319 = vld [vmem:[#allocation8 + $0x200] sm:$0xf]
    %v320 = vld [vmem:[#allocation8 + $0x204] sm:$0xff]
    %v321 = vld [vmem:[#allocation8 + $0x20c] sm:$0xf]
    %v322 = vld [vmem:[#allocation8 + $0x210] sm:$0xff]
    %v323 = vld [vmem:[#allocation8 + $0x218] sm:$0xf]
    %v324 = vld [vmem:[#allocation8 + $0x21c] sm:$0xff]
    %v325 = vld [vmem:[#allocation8 + $0x224] sm:$0xf]
    %v326 = vld [vmem:[#allocation8 + $0x228] sm:$0xff]
    %v327 = vld [vmem:[#allocation8 + $0x230] sm:$0xf]
    %v328 = vld [vmem:[#allocation8 + $0x234] sm:$0xff]
    %v329 = vld [vmem:[#allocation8 + $0x23c] sm:$0xf]
    %v330 = vld [vmem:[#allocation8 + $0x240] sm:$0xff]
    %v331 = vld [vmem:[#allocation8 + $0x248] sm:$0xf]
    %v332 = vld [vmem:[#allocation8 + $0x24c] sm:$0xff]
    %v333 = vld [vmem:[#allocation8 + $0x254] sm:$0xf]
    %v334 = vld [vmem:[#allocation8 + $0x258] sm:$0xff]
    %v335 = vld [vmem:[#allocation8 + $0x260] sm:$0xf]
    %v336 = vld [vmem:[#allocation8 + $0x264] sm:$0xff]
    %v337 = vld [vmem:[#allocation8 + $0x26c] sm:$0xf]
    %v338 = vld [vmem:[#allocation8 + $0x270] sm:$0xff]
    %v339 = vld [vmem:[#allocation8 + $0x278] sm:$0xf]
    %v340 = vld [vmem:[#allocation8 + $0x27c] sm:$0xff]
    %v341 = vld [vmem:[#allocation8 + $0x284] sm:$0xf]
    %v342 = vld [vmem:[#allocation8 + $0x288] sm:$0xff]
    %v343 = vld [vmem:[#allocation8 + $0x290] sm:$0xf]
    %v344 = vld [vmem:[#allocation8 + $0x294] sm:$0xff]
    %v345 = vld [vmem:[#allocation8 + $0x29c] sm:$0xf]
    %v346 = vld [vmem:[#allocation8 + $0x2a0] sm:$0xff]
    %v347 = vld [vmem:[#allocation8 + $0x2a8] sm:$0xf]
    %v348 = vld [vmem:[#allocation8 + $0x2ac] sm:$0xff]
    %v349 = vld [vmem:[#allocation8 + $0x2b4] sm:$0xf]
    %v350 = vld [vmem:[#allocation8 + $0x2b8] sm:$0xff]
    %v351 = vld [vmem:[#allocation8 + $0x2c0] sm:$0xf]
    %v352 = vld [vmem:[#allocation8 + $0x2c4] sm:$0xff]
    %v353 = vld [vmem:[#allocation8 + $0x2cc] sm:$0xf]
    %v354 = vld [vmem:[#allocation8 + $0x2d0] sm:$0xff]
    %v355 = vld [vmem:[#allocation8 + $0x2d8] sm:$0xf]
    %v356 = vld [vmem:[#allocation8 + $0x2dc] sm:$0xff]
    %v357 = vld [vmem:[#allocation8 + $0x2e4] sm:$0xf]
    %v358 = vld [vmem:[#allocation8 + $0x2e8] sm:$0xff]
    %v359 = vld [vmem:[#allocation8 + $0x2f0] sm:$0xf]
    %v360 = vld [vmem:[#allocation8 + $0x2f4] sm:$0xff]
    %v361 = vld [vmem:[#allocation8 + $0x2fc] sm:$0xf]
    %v362 = vld [vmem:[%s4] sm:$0x7]
    %v364 = vlaneseq
    %v365 = vshrl.u32 %v364, 7
    %v366 = vsub.s32 0, %v365
    %v367 = vrot.slane %v362, %v366
    %v368 = vlaneseq
    %v369 = vshrl.u32 %v368, 7
    %v370 = vsub.s32 1, %v369
    %v371 = vrot.slane %v362, %v370
    %v372 = vlaneseq
    %v373 = vshrl.u32 %v372, 7
    %v374 = vsub.s32 2, %v373
    %v375 = vrot.slane %v362, %v374
    %v507 = vunpack.c.l.b16 %v234
    %v508 = vunpack.c.h.b16 %v234
    %v509 = vunpack.c.l.b16 %v235
    %v510 = vunpack.c.l.b16 %v236
    %v511 = vunpack.c.h.b16 %v236
    %v512 = vunpack.c.l.b16 %v237
    %v513 = vunpack.c.l.b16 %v238
    %v514 = vunpack.c.h.b16 %v238
    %v515 = vunpack.c.l.b16 %v239
    %v516 = vunpack.c.l.b16 %v240
    %v517 = vunpack.c.h.b16 %v240
    %v518 = vunpack.c.l.b16 %v241
    %v519 = vunpack.c.l.b16 %v242
    %v520 = vunpack.c.h.b16 %v242
    %v521 = vunpack.c.l.b16 %v243
    %v522 = vunpack.c.l.b16 %v244
    %v523 = vunpack.c.h.b16 %v244
    %v524 = vunpack.c.l.b16 %v245
    %v525 = vunpack.c.l.b16 %v246
    %v526 = vunpack.c.h.b16 %v246
    %v527 = vunpack.c.l.b16 %v247
    %v528 = vunpack.c.l.b16 %v248
    %v529 = vunpack.c.h.b16 %v248
    %v530 = vunpack.c.l.b16 %v249
    %v531 = vunpack.c.l.b16 %v250
    %v532 = vunpack.c.h.b16 %v250
    %v533 = vunpack.c.l.b16 %v251
    %v534 = vunpack.c.l.b16 %v252
    %v535 = vunpack.c.h.b16 %v252
    %v536 = vunpack.c.l.b16 %v253
    %v537 = vunpack.c.l.b16 %v254
    %v538 = vunpack.c.h.b16 %v254
    %v539 = vunpack.c.l.b16 %v255
    %v540 = vunpack.c.l.b16 %v256
    %v541 = vunpack.c.h.b16 %v256
    %v542 = vunpack.c.l.b16 %v257
    %v543 = vunpack.c.l.b16 %v258
    %v544 = vunpack.c.h.b16 %v258
    %v545 = vunpack.c.l.b16 %v259
    %v546 = vunpack.c.l.b16 %v260
    %v547 = vunpack.c.h.b16 %v260
    %v548 = vunpack.c.l.b16 %v261
    %v549 = vunpack.c.l.b16 %v262
    %v550 = vunpack.c.h.b16 %v262
    %v551 = vunpack.c.l.b16 %v263
    %v552 = vunpack.c.l.b16 %v264
    %v553 = vunpack.c.h.b16 %v264
    %v554 = vunpack.c.l.b16 %v265
    %v555 = vunpack.c.l.b16 %v266
    %v556 = vunpack.c.h.b16 %v266
    %v557 = vunpack.c.l.b16 %v267
    %v558 = vunpack.c.l.b16 %v268
    %v559 = vunpack.c.h.b16 %v268
    %v560 = vunpack.c.l.b16 %v269
    %v561 = vunpack.c.l.b16 %v270
    %v562 = vunpack.c.h.b16 %v270
    %v563 = vunpack.c.l.b16 %v271
    %v564 = vunpack.c.l.b16 %v272
    %v565 = vunpack.c.h.b16 %v272
    %v566 = vunpack.c.l.b16 %v273
    %v567 = vunpack.c.l.b16 %v274
    %v568 = vunpack.c.h.b16 %v274
    %v569 = vunpack.c.l.b16 %v275
    %v570 = vunpack.c.l.b16 %v276
    %v571 = vunpack.c.h.b16 %v276
    %v572 = vunpack.c.l.b16 %v277
    %v573 = vunpack.c.l.b16 %v278
    %v574 = vunpack.c.h.b16 %v278
    %v575 = vunpack.c.l.b16 %v279
    %v576 = vunpack.c.l.b16 %v280
    %v577 = vunpack.c.h.b16 %v280
    %v578 = vunpack.c.l.b16 %v281
    %v579 = vunpack.c.l.b16 %v282
    %v580 = vunpack.c.h.b16 %v282
    %v581 = vunpack.c.l.b16 %v283
    %v582 = vunpack.c.l.b16 %v284
    %v583 = vunpack.c.h.b16 %v284
    %v584 = vunpack.c.l.b16 %v285
    %v585 = vunpack.c.l.b16 %v286
    %v586 = vunpack.c.h.b16 %v286
    %v587 = vunpack.c.l.b16 %v287
    %v588 = vunpack.c.l.b16 %v288
    %v589 = vunpack.c.h.b16 %v288
    %v590 = vunpack.c.l.b16 %v289
    %v591 = vunpack.c.l.b16 %v290
    %v592 = vunpack.c.h.b16 %v290
    %v593 = vunpack.c.l.b16 %v291
    %v594 = vunpack.c.l.b16 %v292
    %v595 = vunpack.c.h.b16 %v292
    %v596 = vunpack.c.l.b16 %v293
    %v597 = vunpack.c.l.b16 %v294
    %v598 = vunpack.c.h.b16 %v294
    %v599 = vunpack.c.l.b16 %v295
    %v600 = vunpack.c.l.b16 %v296
    %v601 = vunpack.c.h.b16 %v296
    %v602 = vunpack.c.l.b16 %v297
    %v603 = vunpack.c.l.b16 %v298
    %v604 = vunpack.c.h.b16 %v298
    %v605 = vunpack.c.l.b16 %v299
    %v606 = vunpack.c.l.b16 %v300
    %v607 = vunpack.c.h.b16 %v300
    %v608 = vunpack.c.l.b16 %v301
    %v609 = vunpack.c.l.b16 %v302
    %v610 = vunpack.c.h.b16 %v302
    %v611 = vunpack.c.l.b16 %v303
    %v612 = vunpack.c.l.b16 %v304
    %v613 = vunpack.c.h.b16 %v304
    %v614 = vunpack.c.l.b16 %v305
    %v615 = vunpack.c.l.b16 %v306
    %v616 = vunpack.c.h.b16 %v306
    %v617 = vunpack.c.l.b16 %v307
    %v618 = vunpack.c.l.b16 %v308
    %v619 = vunpack.c.h.b16 %v308
    %v620 = vunpack.c.l.b16 %v309
    %v621 = vunpack.c.l.b16 %v310
    %v622 = vunpack.c.h.b16 %v310
    %v623 = vunpack.c.l.b16 %v311
    %v624 = vunpack.c.l.b16 %v312
    %v625 = vunpack.c.h.b16 %v312
    %v626 = vunpack.c.l.b16 %v313
    %v627 = vunpack.c.l.b16 %v314
    %v628 = vunpack.c.h.b16 %v314
    %v629 = vunpack.c.l.b16 %v315
    %v630 = vunpack.c.l.b16 %v316
    %v631 = vunpack.c.h.b16 %v316
    %v632 = vunpack.c.l.b16 %v317
    %v633 = vunpack.c.l.b16 %v318
    %v634 = vunpack.c.h.b16 %v318
    %v635 = vunpack.c.l.b16 %v319
    %v636 = vunpack.c.l.b16 %v320
    %v637 = vunpack.c.h.b16 %v320
    %v638 = vunpack.c.l.b16 %v321
    %v639 = vunpack.c.l.b16 %v322
    %v640 = vunpack.c.h.b16 %v322
    %v641 = vunpack.c.l.b16 %v323
    %v642 = vunpack.c.l.b16 %v324
    %v643 = vunpack.c.h.b16 %v324
    %v644 = vunpack.c.l.b16 %v325
    %v645 = vunpack.c.l.b16 %v326
    %v646 = vunpack.c.h.b16 %v326
    %v647 = vunpack.c.l.b16 %v327
    %v648 = vunpack.c.l.b16 %v328
    %v649 = vunpack.c.h.b16 %v328
    %v650 = vunpack.c.l.b16 %v329
    %v651 = vunpack.c.l.b16 %v330
    %v652 = vunpack.c.h.b16 %v330
    %v653 = vunpack.c.l.b16 %v331
    %v654 = vunpack.c.l.b16 %v332
    %v655 = vunpack.c.h.b16 %v332
    %v656 = vunpack.c.l.b16 %v333
    %v657 = vunpack.c.l.b16 %v334
    %v658 = vunpack.c.h.b16 %v334
    %v659 = vunpack.c.l.b16 %v335
    %v660 = vunpack.c.l.b16 %v336
    %v661 = vunpack.c.h.b16 %v336
    %v662 = vunpack.c.l.b16 %v337
    %v663 = vunpack.c.l.b16 %v338
    %v664 = vunpack.c.h.b16 %v338
    %v665 = vunpack.c.l.b16 %v339
    %v666 = vunpack.c.l.b16 %v340
    %v667 = vunpack.c.h.b16 %v340
    %v668 = vunpack.c.l.b16 %v341
    %v669 = vunpack.c.l.b16 %v342
    %v670 = vunpack.c.h.b16 %v342
    %v671 = vunpack.c.l.b16 %v343
    %v672 = vunpack.c.l.b16 %v344
    %v673 = vunpack.c.h.b16 %v344
    %v674 = vunpack.c.l.b16 %v345
    %v675 = vunpack.c.l.b16 %v346
    %v676 = vunpack.c.h.b16 %v346
    %v677 = vunpack.c.l.b16 %v347
    %v678 = vunpack.c.l.b16 %v348
    %v679 = vunpack.c.h.b16 %v348
    %v680 = vunpack.c.l.b16 %v349
    %v681 = vunpack.c.l.b16 %v350
    %v682 = vunpack.c.h.b16 %v350
    %v683 = vunpack.c.l.b16 %v351
    %v684 = vunpack.c.l.b16 %v352
    %v685 = vunpack.c.h.b16 %v352
    %v686 = vunpack.c.l.b16 %v353
    %v687 = vunpack.c.l.b16 %v354
    %v688 = vunpack.c.h.b16 %v354
    %v689 = vunpack.c.l.b16 %v355
    %v690 = vunpack.c.l.b16 %v356
    %v691 = vunpack.c.h.b16 %v356
    %v692 = vunpack.c.l.b16 %v357
    %v693 = vunpack.c.l.b16 %v358
    %v694 = vunpack.c.h.b16 %v358
    %v695 = vunpack.c.l.b16 %v359
    %v696 = vunpack.c.l.b16 %v360
    %v697 = vunpack.c.h.b16 %v360
    %v698 = vunpack.c.l.b16 %v361
    %v699 = vpack.c.b16 %v510, %v507
    %v700 = vpack.c.b16 %v511, %v508
    %v701 = vpack.c.b16 %v512, %v509
    %v702 = vpack.c.b16 %v516, %v513
    %v703 = vpack.c.b16 %v517, %v514
    %v704 = vpack.c.b16 %v518, %v515
    %v705 = vpack.c.b16 %v522, %v519
    %v706 = vpack.c.b16 %v523, %v520
    %v707 = vpack.c.b16 %v524, %v521
    %v708 = vpack.c.b16 %v528, %v525
    %v709 = vpack.c.b16 %v529, %v526
    %v710 = vpack.c.b16 %v530, %v527
    %v711 = vpack.c.b16 %v534, %v531
    %v712 = vpack.c.b16 %v535, %v532
    %v713 = vpack.c.b16 %v536, %v533
    %v714 = vpack.c.b16 %v540, %v537
    %v715 = vpack.c.b16 %v541, %v538
    %v716 = vpack.c.b16 %v542, %v539
    %v717 = vpack.c.b16 %v546, %v543
    %v718 = vpack.c.b16 %v547, %v544
    %v719 = vpack.c.b16 %v548, %v545
    %v720 = vpack.c.b16 %v552, %v549
    %v721 = vpack.c.b16 %v553, %v550
    %v722 = vpack.c.b16 %v554, %v551
    %v723 = vpack.c.b16 %v558, %v555
    %v724 = vpack.c.b16 %v559, %v556
    %v725 = vpack.c.b16 %v560, %v557
    %v726 = vpack.c.b16 %v564, %v561
    %v727 = vpack.c.b16 %v565, %v562
    %v728 = vpack.c.b16 %v566, %v563
    %v729 = vpack.c.b16 %v570, %v567
    %v730 = vpack.c.b16 %v571, %v568
    %v731 = vpack.c.b16 %v572, %v569
    %v732 = vpack.c.b16 %v576, %v573
    %v733 = vpack.c.b16 %v577, %v574
    %v734 = vpack.c.b16 %v578, %v575
    %v735 = vpack.c.b16 %v582, %v579
    %v736 = vpack.c.b16 %v583, %v580
    %v737 = vpack.c.b16 %v584, %v581
    %v738 = vpack.c.b16 %v588, %v585
    %v739 = vpack.c.b16 %v589, %v586
    %v740 = vpack.c.b16 %v590, %v587
    %v741 = vpack.c.b16 %v594, %v591
    %v742 = vpack.c.b16 %v595, %v592
    %v743 = vpack.c.b16 %v596, %v593
    %v744 = vpack.c.b16 %v600, %v597
    %v745 = vpack.c.b16 %v601, %v598
    %v746 = vpack.c.b16 %v602, %v599
    %v747 = vpack.c.b16 %v606, %v603
    %v748 = vpack.c.b16 %v607, %v604
    %v749 = vpack.c.b16 %v608, %v605
    %v750 = vpack.c.b16 %v612, %v609
    %v751 = vpack.c.b16 %v613, %v610
    %v752 = vpack.c.b16 %v614, %v611
    %v753 = vpack.c.b16 %v618, %v615
    %v754 = vpack.c.b16 %v619, %v616
    %v755 = vpack.c.b16 %v620, %v617
    %v756 = vpack.c.b16 %v624, %v621
    %v757 = vpack.c.b16 %v625, %v622
    %v758 = vpack.c.b16 %v626, %v623
    %v759 = vpack.c.b16 %v630, %v627
    %v760 = vpack.c.b16 %v631, %v628
    %v761 = vpack.c.b16 %v632, %v629
    %v762 = vpack.c.b16 %v636, %v633
    %v763 = vpack.c.b16 %v637, %v634
    %v764 = vpack.c.b16 %v638, %v635
    %v765 = vpack.c.b16 %v642, %v639
    %v766 = vpack.c.b16 %v643, %v640
    %v767 = vpack.c.b16 %v644, %v641
    %v768 = vpack.c.b16 %v648, %v645
    %v769 = vpack.c.b16 %v649, %v646
    %v770 = vpack.c.b16 %v650, %v647
    %v771 = vpack.c.b16 %v654, %v651
    %v772 = vpack.c.b16 %v655, %v652
    %v773 = vpack.c.b16 %v656, %v653
    %v774 = vpack.c.b16 %v660, %v657
    %v775 = vpack.c.b16 %v661, %v658
    %v776 = vpack.c.b16 %v662, %v659
    %v777 = vpack.c.b16 %v666, %v663
    %v778 = vpack.c.b16 %v667, %v664
    %v779 = vpack.c.b16 %v668, %v665
    %v780 = vpack.c.b16 %v672, %v669
    %v781 = vpack.c.b16 %v673, %v670
    %v782 = vpack.c.b16 %v674, %v671
    %v783 = vpack.c.b16 %v678, %v675
    %v784 = vpack.c.b16 %v679, %v676
    %v785 = vpack.c.b16 %v680, %v677
    %v786 = vpack.c.b16 %v684, %v681
    %v787 = vpack.c.b16 %v685, %v682
    %v788 = vpack.c.b16 %v686, %v683
    %v789 = vpack.c.b16 %v690, %v687
    %v790 = vpack.c.b16 %v691, %v688
    %v791 = vpack.c.b16 %v692, %v689
    %v792 = vpack.c.b16 %v696, %v693
    %v793 = vpack.c.b16 %v697, %v694
    %v794 = vpack.c.b16 %v698, %v695
    %891 = vmatprep.subr.bf16.mxu0 %v700
    %892 = vmatpush1.bf16.msra.mxu0 %v699
    %893 = vmatprep.subr.bf16.mxu0 %v703
    %894 = vmatpush1.bf16.msra.mxu0 %v702
    %895 = vmatprep.subr.bf16.mxu0 %v706
    %896 = vmatpush1.bf16.msra.mxu0 %v705
    %897 = vmatprep.subr.bf16.mxu0 %v709
    %898 = vmatpush1.bf16.msra.mxu0 %v708
    %899 = vmatprep.subr.bf16.mxu0 %v712
    %900 = vmatpush1.bf16.msra.mxu0 %v711
    %901 = vmatprep.subr.bf16.mxu0 %v715
    %902 = vmatpush1.bf16.msra.mxu0 %v714
    %903 = vmatprep.subr.bf16.mxu0 %v718
    %904 = vmatpush1.bf16.msra.mxu0 %v717
    %905 = vmatprep.subr.bf16.mxu0 %v721
    %906 = vmatpush1.bf16.msra.mxu0 %v720
    %907 = vmatprep.subr.bf16.mxu0 %v724
    %908 = vmatpush1.bf16.msra.mxu0 %v723
    %909 = vmatprep.subr.bf16.mxu0 %v727
    %910 = vmatpush1.bf16.msra.mxu0 %v726
    %911 = vmatprep.subr.bf16.mxu0 %v730
    %912 = vmatpush1.bf16.msra.mxu0 %v729
    %913 = vmatprep.subr.bf16.mxu0 %v733
    %914 = vmatpush1.bf16.msra.mxu0 %v732
    %915 = vmatprep.subr.bf16.mxu0 %v736
    %916 = vmatpush1.bf16.msra.mxu0 %v735
    %917 = vmatprep.subr.bf16.mxu0 %v739
    %918 = vmatpush1.bf16.msra.mxu0 %v738
    %919 = vmatprep.subr.bf16.mxu0 %v742
    %920 = vmatpush1.bf16.msra.mxu0 %v741
    %921 = vmatprep.subr.bf16.mxu0 %v745
    %922 = vmatpush1.bf16.msra.mxu0 %v744
    %923 = vmatprep.mubr.bf16.mxu0 %v231
    %924 = vmatmul.mubr.bf16.gmra.mrb[0].mxu0 %v230
    %v925 = vpop.f32.mrb[0].mxu0
    %v926 = vadd.f32 %v367, %v925
    %v927 = vpop.f32.mrb[0].mxu0
    %v928 = vadd.f32 %v371, %v927
    %v929 = vpop.f32.mrb[0].mxu0
    %v930 = vadd.f32 %v367, %v929
    %v931 = vpop.f32.mrb[0].mxu0
    %v932 = vadd.f32 %v371, %v931
    %933 = vdwg.mxu0
    %934 = vmatprep.subr.bf16.mxu0 %v748
    %935 = vmatpush1.bf16.msra.mxu0 %v747
    %936 = vmatprep.subr.bf16.mxu0 %v751
    %937 = vmatpush1.bf16.msra.mxu0 %v750
    %938 = vmatprep.subr.bf16.mxu0 %v754
    %939 = vmatpush1.bf16.msra.mxu0 %v753
    %940 = vmatprep.subr.bf16.mxu0 %v757
    %941 = vmatpush1.bf16.msra.mxu0 %v756
    %942 = vmatprep.subr.bf16.mxu0 %v760
    %943 = vmatpush1.bf16.msra.mxu0 %v759
    %944 = vmatprep.subr.bf16.mxu0 %v763
    %945 = vmatpush1.bf16.msra.mxu0 %v762
    %946 = vmatprep.subr.bf16.mxu0 %v766
    %947 = vmatpush1.bf16.msra.mxu0 %v765
    %948 = vmatprep.subr.bf16.mxu0 %v769
    %949 = vmatpush1.bf16.msra.mxu0 %v768
    %950 = vmatprep.subr.bf16.mxu0 %v772
    %951 = vmatpush1.bf16.msra.mxu0 %v771
    %952 = vmatprep.subr.bf16.mxu0 %v775
    %953 = vmatpush1.bf16.msra.mxu0 %v774
    %954 = vmatprep.subr.bf16.mxu0 %v778
    %955 = vmatpush1.bf16.msra.mxu0 %v777
    %956 = vmatprep.subr.bf16.mxu0 %v781
    %957 = vmatpush1.bf16.msra.mxu0 %v780
    %958 = vmatprep.subr.bf16.mxu0 %v784
    %959 = vmatpush1.bf16.msra.mxu0 %v783
    %960 = vmatprep.subr.bf16.mxu0 %v787
    %961 = vmatpush1.bf16.msra.mxu0 %v786
    %962 = vmatprep.subr.bf16.mxu0 %v790
    %963 = vmatpush1.bf16.msra.mxu0 %v789
    %964 = vmatprep.subr.bf16.mxu0 %v793
    %965 = vmatpush1.bf16.msra.mxu0 %v792
    %966 = vmatprep.mubr.bf16.mxu0 %v233
    %967 = vmatmul.mubr.bf16.gmra.mrb[0].mxu0 %v232
    %v968 = vpop.f32.mrb[0].mxu0
    %v969 = vadd.f32 %v926, %v968
    %v970 = vpop.f32.mrb[0].mxu0
    %v971 = vadd.f32 %v928, %v970
    %v972 = vpop.f32.mrb[0].mxu0
    %v973 = vadd.f32 %v930, %v972
    %v974 = vpop.f32.mrb[0].mxu0
    %v975 = vadd.f32 %v932, %v974
    %976 = vdwg.mxu0
    %977 = vmatprep.subr.bf16.mxu0 0
    %978 = vmatpush1.bf16.msra.mxu0 %v701
    %979 = vmatprep.subr.bf16.mxu0 0
    %980 = vmatpush1.bf16.msra.mxu0 %v704
    %981 = vmatprep.subr.bf16.mxu0 0
    %982 = vmatpush1.bf16.msra.mxu0 %v707
    %983 = vmatprep.subr.bf16.mxu0 0
    %984 = vmatpush1.bf16.msra.mxu0 %v710
    %985 = vmatprep.subr.bf16.mxu0 0
    %986 = vmatpush1.bf16.msra.mxu0 %v713
    %987 = vmatprep.subr.bf16.mxu0 0
    %988 = vmatpush1.bf16.msra.mxu0 %v716
    %989 = vmatprep.subr.bf16.mxu0 0
    %990 = vmatpush1.bf16.msra.mxu0 %v719
    %991 = vmatprep.subr.bf16.mxu0 0
    %992 = vmatpush1.bf16.msra.mxu0 %v722
    %993 = vmatprep.subr.bf16.mxu0 0
    %994 = vmatpush1.bf16.msra.mxu0 %v725
    %995 = vmatprep.subr.bf16.mxu0 0
    %996 = vmatpush1.bf16.msra.mxu0 %v728
    %997 = vmatprep.subr.bf16.mxu0 0
    %998 = vmatpush1.bf16.msra.mxu0 %v731
    %999 = vmatprep.subr.bf16.mxu0 0
    %1000 = vmatpush1.bf16.msra.mxu0 %v734
    %1001 = vmatprep.subr.bf16.mxu0 0
    %1002 = vmatpush1.bf16.msra.mxu0 %v737
    %1003 = vmatprep.subr.bf16.mxu0 0
    %1004 = vmatpush1.bf16.msra.mxu0 %v740
    %1005 = vmatprep.subr.bf16.mxu0 0
    %1006 = vmatpush1.bf16.msra.mxu0 %v743
    %1007 = vmatprep.subr.bf16.mxu0 0
    %1008 = vmatpush1.bf16.msra.mxu0 %v746
    %1009 = vmatprep.mubr.bf16.mxu0 %v231
    %1010 = vmatmul.mubr.bf16.gmra.mrb[0].mxu0 %v230
    %v1011 = vpop.f32.mrb[0].mxu0
    %v1012 = vadd.f32 %v375, %v1011
    %v1013 = vpop.f32.mrb[0].mxu0
    %v1014 = vpop.f32.mrb[0].mxu0
    %v1015 = vadd.f32 %v375, %v1014
    %v1016 = vpop.f32.mrb[0].mxu0
    %1017 = vdwg.mxu0
    %1018 = vmatprep.subr.bf16.mxu0 0
    %1019 = vmatpush1.bf16.msra.mxu0 %v749
    %1020 = vmatprep.subr.bf16.mxu0 0
    %1021 = vmatpush1.bf16.msra.mxu0 %v752
    %1022 = vmatprep.subr.bf16.mxu0 0
    %1023 = vmatpush1.bf16.msra.mxu0 %v755
    %1024 = vmatprep.subr.bf16.mxu0 0
    %1025 = vmatpush1.bf16.msra.mxu0 %v758
    %1026 = vmatprep.subr.bf16.mxu0 0
    %1027 = vmatpush1.bf16.msra.mxu0 %v761
    %1028 = vmatprep.subr.bf16.mxu0 0
    %1029 = vmatpush1.bf16.msra.mxu0 %v764
    %1030 = vmatprep.subr.bf16.mxu0 0
    %1031 = vmatpush1.bf16.msra.mxu0 %v767
    %1032 = vmatprep.subr.bf16.mxu0 0
    %1033 = vmatpush1.bf16.msra.mxu0 %v770
    %1034 = vmatprep.subr.bf16.mxu0 0
    %1035 = vmatpush1.bf16.msra.mxu0 %v773
    %1036 = vmatprep.subr.bf16.mxu0 0
    %1037 = vmatpush1.bf16.msra.mxu0 %v776
    %1038 = vmatprep.subr.bf16.mxu0 0
    %1039 = vmatpush1.bf16.msra.mxu0 %v779
    %1040 = vmatprep.subr.bf16.mxu0 0
    %1041 = vmatpush1.bf16.msra.mxu0 %v782
    %1042 = vmatprep.subr.bf16.mxu0 0
    %1043 = vmatpush1.bf16.msra.mxu0 %v785
    %1044 = vmatprep.subr.bf16.mxu0 0
    %1045 = vmatpush1.bf16.msra.mxu0 %v788
    %1046 = vmatprep.subr.bf16.mxu0 0
    %1047 = vmatpush1.bf16.msra.mxu0 %v791
    %1048 = vmatprep.subr.bf16.mxu0 0
    %1049 = vmatpush1.bf16.msra.mxu0 %v794
    %1050 = vmatprep.mubr.bf16.mxu0 %v233
    %1051 = vmatmul.mubr.bf16.gmra.mrb[0].mxu0 %v232
    %v1052 = vpop.f32.mrb[0].mxu0
    %v1053 = vadd.f32 %v1012, %v1052
    %v1054 = vpop.f32.mrb[0].mxu0
    %v1055 = vpop.f32.mrb[0].mxu0
    %v1056 = vadd.f32 %v1015, %v1055
    %v1057 = vpop.f32.mrb[0].mxu0
    %1058 = vdwg.mxu0
    %v1059 = vmul.f32 %v969, 0.01
    %v1060 = vmul.f32 %v971, 0.01
    %v1061 = vmul.f32 %v1053, 0.01
    %v1062 = vmul.f32 %v973, 0.01
    %v1063 = vmul.f32 %v975, 0.01
    %v1064 = vmul.f32 %v1056, 0.01
    %v1065 = vmax.f32 %v969, %v1059
    %v1066 = vmax.f32 %v971, %v1060
    %v1067 = vmax.f32 %v1053, %v1061
    %v1068 = vmax.f32 %v973, %v1062
    %v1069 = vmax.f32 %v975, %v1063
    %v1070 = vmax.f32 %v1056, %v1064
    %v1071 = vld [vmem:[%s5] sm:$0x7]
    %v1072 = vld [vmem:[#allocation2] sm:$0x1]
    %1074 = vset.pattern.permute.xlu0 0
    %1075 = vperm.xlu0 %1074, %v1072
    %v1076 = vpop.permute.xlu0 %1075
    %v1078 = vlaneseq
    %v1079 = vshrl.u32 %v1078, 7
    %v1080 = vsub.s32 0, %v1079
    %v1081 = vrot.slane %v1076, %v1080
    %v1083 = vlaneseq
    %v1084 = vshrl.u32 %v1083, 7
    %v1085 = vsub.s32 0, %v1084
    %v1086 = vrot.slane %v1071, %v1085
    %v1087 = vlaneseq
    %v1088 = vshrl.u32 %v1087, 7
    %v1089 = vsub.s32 1, %v1088
    %v1090 = vrot.slane %v1071, %v1089
    %v1091 = vlaneseq
    %v1092 = vshrl.u32 %v1091, 7
    %v1093 = vsub.s32 2, %v1092
    %v1094 = vrot.slane %v1071, %v1093
    %1098 = vmatprep.subr.mxu0 %v1066
    %1099 = vmatpush1.xpose.msra.mxu0 %v1065
    %1100 = vmatprep.subr.mxu0 %v1069
    %1101 = vmatpush1.xpose.msra.mxu0 %v1068
    %1102 = vmatprep.subr.mxu0 0.0
    %1103 = vmatpush1.xpose.msra.mxu0 0.0
    %1104 = vmatprep.subr.mxu0 0.0
    %1105 = vmatpush1.xpose.msra.mxu0 0.0
    %1106 = vmatprep.subr.mxu0 0.0
    %1107 = vmatpush1.xpose.msra.mxu0 0.0
    %1108 = vmatprep.subr.mxu0 0.0
    %1109 = vmatpush1.xpose.msra.mxu0 0.0
    %1110 = vmatprep.subr.mxu0 0.0
    %1111 = vmatpush1.xpose.msra.mxu0 0.0
    %1112 = vmatprep.subr.mxu0 0.0
    %1113 = vmatpush1.xpose.msra.mxu0 0.0
    %1114 = vmatprep.subr.mxu0 0.0
    %1115 = vmatpush1.xpose.msra.mxu0 0.0
    %1116 = vmatprep.subr.mxu0 0.0
    %1117 = vmatpush1.xpose.msra.mxu0 0.0
    %1118 = vmatprep.subr.mxu0 0.0
    %1119 = vmatpush1.xpose.msra.mxu0 0.0
    %1120 = vmatprep.subr.mxu0 0.0
    %1121 = vmatpush1.xpose.msra.mxu0 0.0
    %1122 = vmatprep.subr.mxu0 0.0
    %1123 = vmatpush1.xpose.msra.mxu0 0.0
    %1124 = vmatprep.subr.mxu0 0.0
    %1125 = vmatpush1.xpose.msra.mxu0 0.0
    %1126 = vmatprep.subr.mxu0 0.0
    %1127 = vmatpush1.xpose.msra.mxu0 0.0
    %1128 = vmatprep.subr.mxu0 0.0
    %1129 = vmatpush1.xpose.msra.mxu0 0.0
    %1130 = vmatprep.subr.mxu0 0.0
    %1131 = vmatpush1.xpose.msra.mxu0 0.0
    %1132 = vmatprep.subr.mxu0 0.0
    %1133 = vmatpush1.xpose.msra.mxu0 0.0
    %1134 = vmatprep.subr.mxu0 0.0
    %1135 = vmatpush1.xpose.msra.mxu0 0.0
    %1136 = vmatprep.subr.mxu0 0.0
    %1137 = vmatpush1.xpose.msra.mxu0 0.0
    %1138 = vmatprep.subr.mxu0 0.0
    %1139 = vmatpush1.xpose.msra.mxu0 0.0
    %1140 = vmatprep.subr.mxu0 0.0
    %1141 = vmatpush1.xpose.msra.mxu0 0.0
    %1142 = vmatprep.subr.mxu0 0.0
    %1143 = vmatpush1.xpose.msra.mxu0 0.0
    %1144 = vmatprep.subr.mxu0 0.0
    %1145 = vmatpush1.xpose.msra.mxu0 0.0
    %1146 = vmatprep.subr.mxu0 0.0
    %1147 = vmatpush1.xpose.msra.mxu0 0.0
    %1148 = vmatprep.subr.mxu0 0.0
    %1149 = vmatpush1.xpose.msra.mxu0 0.0
    %1150 = vmatprep.subr.mxu0 0.0
    %1151 = vmatpush1.xpose.msra.mxu0 0.0
    %1152 = vmatprep.subr.mxu0 0.0
    %1153 = vmatpush1.xpose.msra.mxu0 0.0
    %1154 = vmatprep.subr.mxu0 0.0
    %1155 = vmatpush1.xpose.msra.mxu0 0.0
    %1156 = vmatprep.subr.mxu0 0.0
    %1157 = vmatpush1.xpose.msra.mxu0 0.0
    %1158 = vmatprep.subr.mxu0 0.0
    %1159 = vmatpush1.xpose.msra.mxu0 0.0
    %1160 = vmatprep.subr.mxu0 0.0
    %1161 = vmatpush1.xpose.msra.mxu0 0.0
    %1162 = vmatprep.mubr.f32.mxu0 %v1090
    %1163 = vmatmul.mubr.f32.gmra.mrb[0].mxu0 %v1086
    %v1164 = vpop.f32.mrb[0].mxu0
    %v1165 = vadd.f32 %v1081, %v1164
    %v1166 = vpop.f32.mrb[0].mxu0
    %1167 = vdwg.mxu0
    %1168 = vmatprep.subr.mxu0 0.0
    %1169 = vmatpush1.xpose.msra.mxu0 %v1067
    %1170 = vmatprep.subr.mxu0 0.0
    %1171 = vmatpush1.xpose.msra.mxu0 %v1070
    %1172 = vmatprep.subr.mxu0 0.0
    %1173 = vmatpush1.xpose.msra.mxu0 0.0
    %1174 = vmatprep.subr.mxu0 0.0
    %1175 = vmatpush1.xpose.msra.mxu0 0.0
    %1176 = vmatprep.subr.mxu0 0.0
    %1177 = vmatpush1.xpose.msra.mxu0 0.0
    %1178 = vmatprep.subr.mxu0 0.0
    %1179 = vmatpush1.xpose.msra.mxu0 0.0
    %1180 = vmatprep.subr.mxu0 0.0
    %1181 = vmatpush1.xpose.msra.mxu0 0.0
    %1182 = vmatprep.subr.mxu0 0.0
    %1183 = vmatpush1.xpose.msra.mxu0 0.0
    %1184 = vmatprep.subr.mxu0 0.0
    %1185 = vmatpush1.xpose.msra.mxu0 0.0
    %1186 = vmatprep.subr.mxu0 0.0
    %1187 = vmatpush1.xpose.msra.mxu0 0.0
    %1188 = vmatprep.subr.mxu0 0.0
    %1189 = vmatpush1.xpose.msra.mxu0 0.0
    %1190 = vmatprep.subr.mxu0 0.0
    %1191 = vmatpush1.xpose.msra.mxu0 0.0
    %1192 = vmatprep.subr.mxu0 0.0
    %1193 = vmatpush1.xpose.msra.mxu0 0.0
    %1194 = vmatprep.subr.mxu0 0.0
    %1195 = vmatpush1.xpose.msra.mxu0 0.0
    %1196 = vmatprep.subr.mxu0 0.0
    %1197 = vmatpush1.xpose.msra.mxu0 0.0
    %1198 = vmatprep.subr.mxu0 0.0
    %1199 = vmatpush1.xpose.msra.mxu0 0.0
    %1200 = vmatprep.subr.mxu0 0.0
    %1201 = vmatpush1.xpose.msra.mxu0 0.0
    %1202 = vmatprep.subr.mxu0 0.0
    %1203 = vmatpush1.xpose.msra.mxu0 0.0
    %1204 = vmatprep.subr.mxu0 0.0
    %1205 = vmatpush1.xpose.msra.mxu0 0.0
    %1206 = vmatprep.subr.mxu0 0.0
    %1207 = vmatpush1.xpose.msra.mxu0 0.0
    %1208 = vmatprep.subr.mxu0 0.0
    %1209 = vmatpush1.xpose.msra.mxu0 0.0
    %1210 = vmatprep.subr.mxu0 0.0
    %1211 = vmatpush1.xpose.msra.mxu0 0.0
    %1212 = vmatprep.subr.mxu0 0.0
    %1213 = vmatpush1.xpose.msra.mxu0 0.0
    %1214 = vmatprep.subr.mxu0 0.0
    %1215 = vmatpush1.xpose.msra.mxu0 0.0
    %1216 = vmatprep.subr.mxu0 0.0
    %1217 = vmatpush1.xpose.msra.mxu0 0.0
    %1218 = vmatprep.subr.mxu0 0.0
    %1219 = vmatpush1.xpose.msra.mxu0 0.0
    %1220 = vmatprep.subr.mxu0 0.0
    %1221 = vmatpush1.xpose.msra.mxu0 0.0
    %1222 = vmatprep.subr.mxu0 0.0
    %1223 = vmatpush1.xpose.msra.mxu0 0.0
    %1224 = vmatprep.subr.mxu0 0.0
    %1225 = vmatpush1.xpose.msra.mxu0 0.0
    %1226 = vmatprep.subr.mxu0 0.0
    %1227 = vmatpush1.xpose.msra.mxu0 0.0
    %1228 = vmatprep.subr.mxu0 0.0
    %1229 = vmatpush1.xpose.msra.mxu0 0.0
    %1230 = vmatprep.subr.mxu0 0.0
    %1231 = vmatpush1.xpose.msra.mxu0 0.0
    %1232 = vmatprep.mubr.f32.mxu0 0.0
    %1233 = vmatmul.mubr.f32.gmra.mrb[0].mxu0 %v1094
    %v1234 = vpop.f32.mrb[0].mxu0
    %v1235 = vadd.f32 %v1165, %v1234
    %v1236 = vpop.f32.mrb[0].mxu0
    %1237 = vdwg.mxu0
    %v1238 = vxor.u32 %v1235, 2147483648
    %v1239 = vmul.f32 %v1238, 1.442695
    %v1240 = vpow.pop %v1239
    %v1241 = vadd.f32 %v1240, 1.0
    %v1242 = vrcp.pop %v1241
    %v1243 = vmul.f32 1.0, %v1242
    %vm1244 = vcmask 122880
    %1245 = vst.msk [vmem:[#allocation9] sm:$0x1] %vm1244, %v1243
    // Predicated region
    $region42: #{tpu_custom_call.1} parent=1 // pred_check
      _
    $region43: #{tpu_custom_call.1} parent=1 // pred_check_branch
      %1247 = sbr.rel (0) target = $region45
    $region44: #{tpu_custom_call.1} parent=1 // pred_region
      %s1249 = ssub.s32 16, 16
      %1250 = vsyncadd [#allocation5], %s1249
      %s1252 = sshll.u32 [#allocation9], 4
      %s1253 = int_to_ptr.vmem [resolvable:$true] %s1252
      %1255 = dma.vmem_to_hbm [thread:$0]  %s1253, 16, %s7, [#allocation5]
    $region45: #{tpu_custom_call.1} parent=1 // pred_fallthru
      _
    // Predicated region
    $region46: #{tpu_custom_call.1} parent=1 // pred_check
      _
    $region47: #{tpu_custom_call.1} parent=1 // pred_check_branch
      %1257 = sbr.rel (0) target = $region49
    $region48: #{tpu_custom_call.1} parent=1 // pred_region
      %1258 = dma.done [#allocation5], 16
    $region49: #{tpu_custom_call.1} parent=1 // pred_fallthru
      _
    %1259 = vsyncpa [#allocation4], 1
    %1260 = vsyncpa [#allocation7], 1
    %1261 = vsyncpa [#allocation5], 1

</llo_original>
